<compile_context>
chip_gen: v5e
topology: v5e:2x2
jax: 0.10.0
libtpu: 0.0.40
codegen_flags: <defaults>
</compile_context>

<pallas_src>
import functools

import jax
import jax.numpy as jnp
import numpy as np
from jax import lax
from jax.experimental import pallas as pl
from jax.experimental.pallas import tpu as pltpu


def _round_up(a, b):
    return (a + b - 1) // b * b


def skip_con_pool_kernel(xw_ref, w_ref, shift_ref, out_ref, pooled_ref, *,
                         ps, Wo_pad, TH, LEAD):
    """One grid step = (image n, pooled-row band b). All indexing is static.

    xw_ref    : (ps*ps, (TH+2)*Wo_pad, C_in_k)  pooling-window element k for every
                pitched pixel of the band (incl. the +/-1 pooled-row halo)
    w_ref     : (9, C_in_k, C_out_p)   conv weights with BN scale folded in
    shift_ref : (1, C_out_p)           folded BN shift (incl. conv bias)
    out_ref   : (TH*Wo_pad, C_out_p)   pitched output band (lane-dense)
    pooled_ref: VMEM (LEAD + (TH+2)*Wo_pad + 8, C_in_k) pitched pooled band
    """
    BAND = (TH + 2) * Wo_pad
    TILE = TH * Wo_pad
    C_in_k = pooled_ref.shape[-1]

    # Zero the lead rows every step (one tiny store) so every grid step is
    # fully independent -> ("parallel", "parallel") grid is safe.  The
    # (dy=0, dx=0) tap of the band's first pixel reads into this region.
    pooled_ref[0:LEAD, :] = jnp.zeros((LEAD, C_in_k), pooled_ref.dtype)

    # ---- MaxPool2d (ceil_mode via -inf pad in the wrapper): elementwise max
    # over the ps*ps window slices.
    # NOTE: out-of-image halo rows, rows >= Ho, pitch columns and the channel
    # round-up are ZERO (not -inf) in *all* ps*ps slices, so the pooled band
    # doubles as the conv's zero padding.  Do NOT change those pads to -inf.
    m = xw_ref[0]
    for k in range(1, ps * ps):
        m = jnp.maximum(m, xw_ref[k])
    pooled_ref[pl.ds(LEAD, BAND), :] = m

    # ---- Conv2d 3x3 (BN scale pre-folded): 9 accumulating MXU matmuls over
    # static slices of the pitched pooled band (no im2col slab).
    acc = None
    for dy in range(3):
        for dx in range(3):
            patch = pooled_ref[pl.ds(LEAD + dy * Wo_pad + (dx - 1), TILE), :]
            part = jnp.dot(patch, w_ref[dy * 3 + dx],
                           preferred_element_type=jnp.float32)
            acc = part if acc is None else acc + part

    # ---- folded BN shift + ReLU, lane-dense store ----
    out_ref[...] = jnp.maximum(acc + shift_ref[...], 0.0).astype(out_ref.dtype)


def skip_con_pool(x, conv_w, conv_b, bn_gamma, bn_beta, bn_mean, bn_var,
                  pool_scale, eps=1e-5, operand_dtype=jnp.bfloat16,
                  out_dtype=jnp.float32, band_rows=None):
    N, C_in, H, W = x.shape
    C_out = conv_w.shape[0]
    ps = int(pool_scale)
    Ho, Wo = pl.cdiv(H, ps), pl.cdiv(W, ps)
    Hp, Wp = Ho * ps, Wo * ps

    LANE, SUB = 128, 8
    C_in_k = _round_up(C_in, SUB)       # matmul K dim: true channels rounded to 8
    C_out_p = _round_up(C_out, LANE)    # lane-dense matmul N dim / output
    Wo_pad = _round_up(Wo + 1, SUB)     # pitched row: >=1 zero column between rows
    LEAD = SUB

    # pooled rows per band: keep the f32 accumulator (TILE x C_out_p) ~<= 32 vregs
    if band_rows is None:
        band_rows = max(1, (32 * 1024 // C_out_p) // Wo_pad)
    TH = max(1, min(int(band_rows), Ho))
    n_bands = pl.cdiv(Ho, TH)
    Ho_pad = n_bands * TH
    BAND = (TH + 2) * Wo_pad
    TILE = TH * Wo_pad

    # ---- pooling-window tensor, banded + pitched, TRUE channel width ----
    # ceil_mode: spatial remainder padded with -inf (ignored by the max);
    # pooled-grid padding (halo rows, rows >= Ho, pitch columns, channel
    # round-up) is ZERO in all ps*ps slices -> pooled value 0, which doubles
    # as the conv's zero padding.
    xt = jnp.transpose(x, (0, 2, 3, 1)).astype(operand_dtype)          # NHWC
    xt = jnp.pad(xt, ((0, 0), (0, Hp - H), (0, Wp - W), (0, 0)),
                 constant_values=-jnp.inf)
    xw = (xt.reshape(N, Ho, ps, Wo, ps, C_in)
            .transpose(0, 2, 4, 1, 3, 5)
            .reshape(N, ps * ps, Ho, Wo, C_in))
    xw = jnp.pad(xw, ((0, 0), (0, 0), (1, Ho_pad - Ho + 1),
                      (0, Wo_pad - Wo), (0, C_in_k - C_in)))
    # duplicate the 1-row halo per band so every grid step is independent
    xw = jnp.concatenate([xw[:, :, b * TH: b * TH + TH + 2]
                          for b in range(n_bands)], axis=2)
    xw = xw.reshape(N, ps * ps, n_bands * BAND, C_in_k)

    # ---- conv weights with BN scale folded (f32), then operand dtype ----
    scale = (bn_gamma / jnp.sqrt(bn_var + eps)).astype(jnp.float32)
    w = jnp.transpose(conv_w, (2, 3, 1, 0)).reshape(9, C_in, C_out)
    w = w.astype(jnp.float32) * scale[None, None, :]
    w = jnp.pad(w, ((0, 0), (0, C_in_k - C_in), (0, C_out_p - C_out)))
    w = w.astype(operand_dtype)

    shift = bn_beta + (conv_b - bn_mean) * scale
    shift = jnp.pad(shift.astype(jnp.float32),
                    (0, C_out_p - C_out)).reshape(1, C_out_p)

    # ---- VMEM budget (actual buffer counts; VMEM lane-pads channels to 128) ----
    isz = jnp.dtype(operand_dtype).itemsize
    osz = jnp.dtype(out_dtype).itemsize
    lane_in = _round_up(C_in_k, LANE)
    est = (2 * ps * ps * BAND * lane_in * isz        # xw band block (x2 buffers)
           + 2 * 9 * C_in_k * C_out_p * isz          # weights
           + 2 * SUB * C_out_p * 4                   # shift
           + 2 * TILE * C_out_p * osz                # output band
           + (LEAD + BAND + SUB) * lane_in * isz)    # pooled scratch
    try:
        cap = int(pltpu.get_tpu_info().vmem_capacity_bytes)
    except Exception:
        cap = 64 << 20
    usable = (cap * 3) // 4
    if est > usable:
        raise ValueError(
            f"skipConPool: ~{est >> 20} MiB of VMEM needed per step but only "
            f"~{usable >> 20} MiB usable; reduce band_rows.")
    vmem_limit = int(min(max(2 * est, 16 << 20), usable))

    kernel = functools.partial(skip_con_pool_kernel, ps=ps, Wo_pad=Wo_pad,
                               TH=TH, LEAD=LEAD)
    out_flat = pl.pallas_call(
        kernel,
        out_shape=jax.ShapeDtypeStruct((N, n_bands * TILE, C_out_p), out_dtype),
        grid_spec=pltpu.PrefetchScalarGridSpec(
            num_scalar_prefetch=0,
            grid=(N, n_bands),
            in_specs=[
                pl.BlockSpec((None, ps * ps, BAND, C_in_k),
                             lambda n, b: (n, 0, b, 0)),
                pl.BlockSpec((9, C_in_k, C_out_p), lambda n, b: (0, 0, 0)),
                pl.BlockSpec((1, C_out_p), lambda n, b: (0, 0)),
            ],
            out_specs=pl.BlockSpec((None, TILE, C_out_p),
                                   lambda n, b: (n, b, 0)),
            scratch_shapes=[
                pltpu.VMEM((LEAD + BAND + SUB, C_in_k), operand_dtype),
            ],
        ),
        compiler_params=pltpu.CompilerParams(
            dimension_semantics=("parallel", "parallel"),
            vmem_limit_bytes=vmem_limit),
    )(xw, w, shift)

    # (N, n_bands*TH*Wo_pad, C_out_p) -> NCHW (N, C_out, Ho, Wo)
    # TODO(synk): if the consumer accepts NHWC / 128-padded channels, skip this
    # slice + transpose (extra XLA HBM pass) and emit operand_dtype output.
    out = out_flat.reshape(N, Ho_pad, Wo_pad, C_out_p)[:, :Ho, :Wo, :C_out]
    return out.transpose(0, 3, 1, 2)


def reference(x, conv_w, conv_b, gamma, beta, mean, var, ps, eps=1e-5):
    N, C_in, H, W = x.shape
    Ho, Wo = -(-H // ps), -(-W // ps)
    pooled = lax.reduce_window(
        x, -jnp.inf, lax.max,
        window_dimensions=(1, 1, ps, ps),
        window_strides=(1, 1, ps, ps),
        padding=((0, 0), (0, 0), (0, Ho * ps - H), (0, Wo * ps - W)))
    conv = lax.conv_general_dilated(
        pooled, conv_w, window_strides=(1, 1), padding=((1, 1), (1, 1)),
        dimension_numbers=('NCHW', 'OIHW', 'NCHW'))
    conv = conv + conv_b.reshape(1, -1, 1, 1)
    scale = (gamma / jnp.sqrt(var + eps)).reshape(1, -1, 1, 1)
    y = (conv - mean.reshape(1, -1, 1, 1)) * scale + beta.reshape(1, -1, 1, 1)
    return jnp.maximum(y, 0.0)


if __name__ == "__main__":
    N, C_in, C_out, H, W = 2, 4, 8, 16, 16
    pool_scale = 3   # Ho = Wo = ceil(16/3) = 6 -> exercises ceil_mode

    key = jax.random.PRNGKey(0)
    k1, k2, k3, k4, k5, k6, k7 = jax.random.split(key, 7)
    x = jax.random.normal(k1, (N, C_in, H, W), jnp.float32)
    conv_w = 0.1 * jax.random.normal(k2, (C_out, C_in, 3, 3), jnp.float32)
    conv_b = 0.1 * jax.random.normal(k3, (C_out,), jnp.float32)
    bn_gamma = 1.0 + 0.1 * jax.random.normal(k4, (C_out,), jnp.float32)
    bn_beta = 0.1 * jax.random.normal(k5, (C_out,), jnp.float32)
    bn_mean = 0.1 * jax.random.normal(k6, (C_out,), jnp.float32)
    bn_var = jnp.abs(jax.random.normal(k7, (C_out,), jnp.float32)) + 0.5

    ref = reference(x, conv_w, conv_b, bn_gamma, bn_beta, bn_mean, bn_var,
                    pool_scale)

    # exact path, multiple row bands (exercises the per-band halo logic)
    out_a = skip_con_pool(x, conv_w, conv_b, bn_gamma, bn_beta, bn_mean,
                          bn_var, pool_scale, operand_dtype=jnp.float32,
                          band_rows=2)
    out_a = jax.block_until_ready(out_a)
    np.testing.assert_allclose(np.asarray(out_a), np.asarray(ref),
                               rtol=1e-4, atol=1e-4)

    # exact path, default single band
    out_b = skip_con_pool(x, conv_w, conv_b, bn_gamma, bn_beta, bn_mean,
                          bn_var, pool_scale, operand_dtype=jnp.float32)
    out_b = jax.block_until_ready(out_b)
    np.testing.assert_allclose(np.asarray(out_b), np.asarray(ref),
                               rtol=1e-4, atol=1e-4)

    # default fast path: bf16 MXU operands (pooling also at bf16), f32 accum
    out_c = skip_con_pool(x, conv_w, conv_b, bn_gamma, bn_beta, bn_mean,
                          bn_var, pool_scale)
    out_c = jax.block_until_ready(out_c)
    np.testing.assert_allclose(np.asarray(out_c), np.asarray(ref),
                               rtol=5e-2, atol=5e-2)

    print("KERNEL_OK")
</pallas_src>

<mosaic_0001>
module attributes {stable_mosaic.version = 11 : i64} {
  func.func @skip_con_pool_kernel(%arg0: i32, %arg1: i32, %arg2: memref<1x9x32x8xf32, #tpu.memory_space<vmem>>, %arg3: memref<9x8x128xf32, #tpu.memory_space<vmem>>, %arg4: memref<1x128xf32, #tpu.memory_space<vmem>>, %arg5: memref<1x16x128xf32, #tpu.memory_space<vmem>>, %arg6: memref<48x8xf32, #tpu.memory_space<vmem>>) attributes {dimension_semantics = [#tpu.dimension_semantics<parallel>, #tpu.dimension_semantics<parallel>], iteration_bounds = array<i64: 2, 3>, scalar_prefetch = 0 : i64, scratch_operands = 1 : i64, tpu.core_type = #tpu.core_type<tc>, window_params = [{transform_indices = @transform_0, window_bounds = array<i64: 1, 9, 32, 8>}, {pipeline_mode = #tpu.pipeline_mode<synchronous>, transform_indices = @transform_1, window_bounds = array<i64: 9, 8, 128>}, {pipeline_mode = #tpu.pipeline_mode<synchronous>, transform_indices = @transform_2, window_bounds = array<i64: 1, 128>}, {transform_indices = @transform_3, window_bounds = array<i64: 1, 16, 128>}]} {
    %cst = arith.constant 0.000000e+00 : f32
    %0 = vector.broadcast %cst : f32 to vector<8x8xf32>
    %c0 = arith.constant 0 : index
    %c0_0 = arith.constant 0 : index
    %1 = vector.load %arg6[%c0, %c0_0] : memref<48x8xf32, #tpu.memory_space<vmem>>, vector<8x8xf32>
    tpu.vector_store %arg6[%c0, %c0_0], %0 {strides = array<i32>} : memref<48x8xf32, #tpu.memory_space<vmem>>, vector<8x8xf32>,
    %c0_1 = arith.constant 0 : index
    %c0_2 = arith.constant 0 : index
    %c0_3 = arith.constant 0 : index
    %c0_4 = arith.constant 0 : index
    %2 = vector.load %arg2[%c0_1, %c0_2, %c0_3, %c0_4] : memref<1x9x32x8xf32, #tpu.memory_space<vmem>>, vector<1x1x32x8xf32>
    %3 = vector.shape_cast %2 : vector<1x1x32x8xf32> to vector<32x8xf32>
    %c0_5 = arith.constant 0 : index
    %c1 = arith.constant 1 : index
    %c0_6 = arith.constant 0 : index
    %c0_7 = arith.constant 0 : index
    %4 = vector.load %arg2[%c0_5, %c1, %c0_6, %c0_7] : memref<1x9x32x8xf32, #tpu.memory_space<vmem>>, vector<1x1x32x8xf32>
    %5 = vector.shape_cast %4 : vector<1x1x32x8xf32> to vector<32x8xf32>
    %6 = arith.maximumf %3, %5 : vector<32x8xf32>
    %c0_8 = arith.constant 0 : index
    %c2 = arith.constant 2 : index
    %c0_9 = arith.constant 0 : index
    %c0_10 = arith.constant 0 : index
    %7 = vector.load %arg2[%c0_8, %c2, %c0_9, %c0_10] : memref<1x9x32x8xf32, #tpu.memory_space<vmem>>, vector<1x1x32x8xf32>
    %8 = vector.shape_cast %7 : vector<1x1x32x8xf32> to vector<32x8xf32>
    %9 = arith.maximumf %6, %8 : vector<32x8xf32>
    %c0_11 = arith.constant 0 : index
    %c3 = arith.constant 3 : index
    %c0_12 = arith.constant 0 : index
    %c0_13 = arith.constant 0 : index
    %10 = vector.load %arg2[%c0_11, %c3, %c0_12, %c0_13] : memref<1x9x32x8xf32, #tpu.memory_space<vmem>>, vector<1x1x32x8xf32>
    %11 = vector.shape_cast %10 : vector<1x1x32x8xf32> to vector<32x8xf32>
    %12 = arith.maximumf %9, %11 : vector<32x8xf32>
    %c0_14 = arith.constant 0 : index
    %c4 = arith.constant 4 : index
    %c0_15 = arith.constant 0 : index
    %c0_16 = arith.constant 0 : index
    %13 = vector.load %arg2[%c0_14, %c4, %c0_15, %c0_16] : memref<1x9x32x8xf32, #tpu.memory_space<vmem>>, vector<1x1x32x8xf32>
    %14 = vector.shape_cast %13 : vector<1x1x32x8xf32> to vector<32x8xf32>
    %15 = arith.maximumf %12, %14 : vector<32x8xf32>
    %c0_17 = arith.constant 0 : index
    %c5 = arith.constant 5 : index
    %c0_18 = arith.constant 0 : index
    %c0_19 = arith.constant 0 : index
    %16 = vector.load %arg2[%c0_17, %c5, %c0_18, %c0_19] : memref<1x9x32x8xf32, #tpu.memory_space<vmem>>, vector<1x1x32x8xf32>
    %17 = vector.shape_cast %16 : vector<1x1x32x8xf32> to vector<32x8xf32>
    %18 = arith.maximumf %15, %17 : vector<32x8xf32>
    %c0_20 = arith.constant 0 : index
    %c6 = arith.constant 6 : index
    %c0_21 = arith.constant 0 : index
    %c0_22 = arith.constant 0 : index
    %19 = vector.load %arg2[%c0_20, %c6, %c0_21, %c0_22] : memref<1x9x32x8xf32, #tpu.memory_space<vmem>>, vector<1x1x32x8xf32>
    %20 = vector.shape_cast %19 : vector<1x1x32x8xf32> to vector<32x8xf32>
    %21 = arith.maximumf %18, %20 : vector<32x8xf32>
    %c0_23 = arith.constant 0 : index
    %c7 = arith.constant 7 : index
    %c0_24 = arith.constant 0 : index
    %c0_25 = arith.constant 0 : index
    %22 = vector.load %arg2[%c0_23, %c7, %c0_24, %c0_25] : memref<1x9x32x8xf32, #tpu.memory_space<vmem>>, vector<1x1x32x8xf32>
    %23 = vector.shape_cast %22 : vector<1x1x32x8xf32> to vector<32x8xf32>
    %24 = arith.maximumf %21, %23 : vector<32x8xf32>
    %c0_26 = arith.constant 0 : index
    %c8 = arith.constant 8 : index
    %c0_27 = arith.constant 0 : index
    %c0_28 = arith.constant 0 : index
    %25 = vector.load %arg2[%c0_26, %c8, %c0_27, %c0_28] : memref<1x9x32x8xf32, #tpu.memory_space<vmem>>, vector<1x1x32x8xf32>
    %26 = vector.shape_cast %25 : vector<1x1x32x8xf32> to vector<32x8xf32>
    %27 = arith.maximumf %24, %26 : vector<32x8xf32>
    %c8_29 = arith.constant 8 : index
    %c0_30 = arith.constant 0 : index
    %28 = vector.load %arg6[%c8_29, %c0_30] : memref<48x8xf32, #tpu.memory_space<vmem>>, vector<32x8xf32>
    tpu.vector_store %arg6[%c8_29, %c0_30], %27 {strides = array<i32>} : memref<48x8xf32, #tpu.memory_space<vmem>>, vector<32x8xf32>,
    %c7_31 = arith.constant 7 : index
    %c0_32 = arith.constant 0 : index
    %29 = vector.load %arg6[%c7_31, %c0_32] : memref<48x8xf32, #tpu.memory_space<vmem>>, vector<16x8xf32>
    %c0_33 = arith.constant 0 : index
    %c0_34 = arith.constant 0 : index
    %c0_35 = arith.constant 0 : index
    %30 = vector.load %arg3[%c0_33, %c0_34, %c0_35] : memref<9x8x128xf32, #tpu.memory_space<vmem>>, vector<1x8x128xf32>
    %31 = vector.shape_cast %30 : vector<1x8x128xf32> to vector<8x128xf32>
    %cst_36 = arith.constant dense<0.000000e+00> : vector<16x128xf32>
    %32 = tpu.matmul %29, %31, %cst_36 {dimension_numbers = #tpu.dot_dimension_numbers<[1], [0], [0], [1], [0, 0, 1, 1], [], []>} : vector<16x8xf32>, vector<8x128xf32>, vector<16x128xf32> -> vector<16x128xf32>
    %c8_37 = arith.constant 8 : index
    %c0_38 = arith.constant 0 : index
    %33 = vector.load %arg6[%c8_37, %c0_38] : memref<48x8xf32, #tpu.memory_space<vmem>>, vector<16x8xf32>
    %c1_39 = arith.constant 1 : index
    %c0_40 = arith.constant 0 : index
    %c0_41 = arith.constant 0 : index
    %34 = vector.load %arg3[%c1_39, %c0_40, %c0_41] : memref<9x8x128xf32, #tpu.memory_space<vmem>>, vector<1x8x128xf32>
    %35 = vector.shape_cast %34 : vector<1x8x128xf32> to vector<8x128xf32>
    %cst_42 = arith.constant dense<0.000000e+00> : vector<16x128xf32>
    %36 = tpu.matmul %33, %35, %cst_42 {dimension_numbers = #tpu.dot_dimension_numbers<[1], [0], [0], [1], [0, 0, 1, 1], [], []>} : vector<16x8xf32>, vector<8x128xf32>, vector<16x128xf32> -> vector<16x128xf32>
    %37 = arith.addf %32, %36 : vector<16x128xf32>
    %c9 = arith.constant 9 : index
    %c0_43 = arith.constant 0 : index
    %38 = vector.load %arg6[%c9, %c0_43] : memref<48x8xf32, #tpu.memory_space<vmem>>, vector<16x8xf32>
    %c2_44 = arith.constant 2 : index
    %c0_45 = arith.constant 0 : index
    %c0_46 = arith.constant 0 : index
    %39 = vector.load %arg3[%c2_44, %c0_45, %c0_46] : memref<9x8x128xf32, #tpu.memory_space<vmem>>, vector<1x8x128xf32>
    %40 = vector.shape_cast %39 : vector<1x8x128xf32> to vector<8x128xf32>
    %cst_47 = arith.constant dense<0.000000e+00> : vector<16x128xf32>
    %41 = tpu.matmul %38, %40, %cst_47 {dimension_numbers = #tpu.dot_dimension_numbers<[1], [0], [0], [1], [0, 0, 1, 1], [], []>} : vector<16x8xf32>, vector<8x128xf32>, vector<16x128xf32> -> vector<16x128xf32>
    %42 = arith.addf %37, %41 : vector<16x128xf32>
    %c15 = arith.constant 15 : index
    %c0_48 = arith.constant 0 : index
    %43 = vector.load %arg6[%c15, %c0_48] : memref<48x8xf32, #tpu.memory_space<vmem>>, vector<16x8xf32>
    %c3_49 = arith.constant 3 : index
    %c0_50 = arith.constant 0 : index
    %c0_51 = arith.constant 0 : index
    %44 = vector.load %arg3[%c3_49, %c0_50, %c0_51] : memref<9x8x128xf32, #tpu.memory_space<vmem>>, vector<1x8x128xf32>
    %45 = vector.shape_cast %44 : vector<1x8x128xf32> to vector<8x128xf32>
    %cst_52 = arith.constant dense<0.000000e+00> : vector<16x128xf32>
    %46 = tpu.matmul %43, %45, %cst_52 {dimension_numbers = #tpu.dot_dimension_numbers<[1], [0], [0], [1], [0, 0, 1, 1], [], []>} : vector<16x8xf32>, vector<8x128xf32>, vector<16x128xf32> -> vector<16x128xf32>
    %47 = arith.addf %42, %46 : vector<16x128xf32>
    %c16 = arith.constant 16 : index
    %c0_53 = arith.constant 0 : index
    %48 = vector.load %arg6[%c16, %c0_53] : memref<48x8xf32, #tpu.memory_space<vmem>>, vector<16x8xf32>
    %c4_54 = arith.constant 4 : index
    %c0_55 = arith.constant 0 : index
    %c0_56 = arith.constant 0 : index
    %49 = vector.load %arg3[%c4_54, %c0_55, %c0_56] : memref<9x8x128xf32, #tpu.memory_space<vmem>>, vector<1x8x128xf32>
    %50 = vector.shape_cast %49 : vector<1x8x128xf32> to vector<8x128xf32>
    %cst_57 = arith.constant dense<0.000000e+00> : vector<16x128xf32>
    %51 = tpu.matmul %48, %50, %cst_57 {dimension_numbers = #tpu.dot_dimension_numbers<[1], [0], [0], [1], [0, 0, 1, 1], [], []>} : vector<16x8xf32>, vector<8x128xf32>, vector<16x128xf32> -> vector<16x128xf32>
    %52 = arith.addf %47, %51 : vector<16x128xf32>
    %c17 = arith.constant 17 : index
    %c0_58 = arith.constant 0 : index
    %53 = vector.load %arg6[%c17, %c0_58] : memref<48x8xf32, #tpu.memory_space<vmem>>, vector<16x8xf32>
    %c5_59 = arith.constant 5 : index
    %c0_60 = arith.constant 0 : index
    %c0_61 = arith.constant 0 : index
    %54 = vector.load %arg3[%c5_59, %c0_60, %c0_61] : memref<9x8x128xf32, #tpu.memory_space<vmem>>, vector<1x8x128xf32>
    %55 = vector.shape_cast %54 : vector<1x8x128xf32> to vector<8x128xf32>
    %cst_62 = arith.constant dense<0.000000e+00> : vector<16x128xf32>
    %56 = tpu.matmul %53, %55, %cst_62 {dimension_numbers = #tpu.dot_dimension_numbers<[1], [0], [0], [1], [0, 0, 1, 1], [], []>} : vector<16x8xf32>, vector<8x128xf32>, vector<16x128xf32> -> vector<16x128xf32>
    %57 = arith.addf %52, %56 : vector<16x128xf32>
    %c23 = arith.constant 23 : index
    %c0_63 = arith.constant 0 : index
    %58 = vector.load %arg6[%c23, %c0_63] : memref<48x8xf32, #tpu.memory_space<vmem>>, vector<16x8xf32>
    %c6_64 = arith.constant 6 : index
    %c0_65 = arith.constant 0 : index
    %c0_66 = arith.constant 0 : index
    %59 = vector.load %arg3[%c6_64, %c0_65, %c0_66] : memref<9x8x128xf32, #tpu.memory_space<vmem>>, vector<1x8x128xf32>
    %60 = vector.shape_cast %59 : vector<1x8x128xf32> to vector<8x128xf32>
    %cst_67 = arith.constant dense<0.000000e+00> : vector<16x128xf32>
    %61 = tpu.matmul %58, %60, %cst_67 {dimension_numbers = #tpu.dot_dimension_numbers<[1], [0], [0], [1], [0, 0, 1, 1], [], []>} : vector<16x8xf32>, vector<8x128xf32>, vector<16x128xf32> -> vector<16x128xf32>
    %62 = arith.addf %57, %61 : vector<16x128xf32>
    %c24 = arith.constant 24 : index
    %c0_68 = arith.constant 0 : index
    %63 = vector.load %arg6[%c24, %c0_68] : memref<48x8xf32, #tpu.memory_space<vmem>>, vector<16x8xf32>
    %c7_69 = arith.constant 7 : index
    %c0_70 = arith.constant 0 : index
    %c0_71 = arith.constant 0 : index
    %64 = vector.load %arg3[%c7_69, %c0_70, %c0_71] : memref<9x8x128xf32, #tpu.memory_space<vmem>>, vector<1x8x128xf32>
    %65 = vector.shape_cast %64 : vector<1x8x128xf32> to vector<8x128xf32>
    %cst_72 = arith.constant dense<0.000000e+00> : vector<16x128xf32>
    %66 = tpu.matmul %63, %65, %cst_72 {dimension_numbers = #tpu.dot_dimension_numbers<[1], [0], [0], [1], [0, 0, 1, 1], [], []>} : vector<16x8xf32>, vector<8x128xf32>, vector<16x128xf32> -> vector<16x128xf32>
    %67 = arith.addf %62, %66 : vector<16x128xf32>
    %c25 = arith.constant 25 : index
    %c0_73 = arith.constant 0 : index
    %68 = vector.load %arg6[%c25, %c0_73] : memref<48x8xf32, #tpu.memory_space<vmem>>, vector<16x8xf32>
    %c8_74 = arith.constant 8 : index
    %c0_75 = arith.constant 0 : index
    %c0_76 = arith.constant 0 : index
    %69 = vector.load %arg3[%c8_74, %c0_75, %c0_76] : memref<9x8x128xf32, #tpu.memory_space<vmem>>, vector<1x8x128xf32>
    %70 = vector.shape_cast %69 : vector<1x8x128xf32> to vector<8x128xf32>
    %cst_77 = arith.constant dense<0.000000e+00> : vector<16x128xf32>
    %71 = tpu.matmul %68, %70, %cst_77 {dimension_numbers = #tpu.dot_dimension_numbers<[1], [0], [0], [1], [0, 0, 1, 1], [], []>} : vector<16x8xf32>, vector<8x128xf32>, vector<16x128xf32> -> vector<16x128xf32>
    %72 = arith.addf %67, %71 : vector<16x128xf32>
    %c0_78 = arith.constant 0 : index
    %c0_79 = arith.constant 0 : index
    %73 = vector.load %arg4[%c0_78, %c0_79] : memref<1x128xf32, #tpu.memory_space<vmem>>, vector<1x128xf32>
    %74 = vector.broadcast %73 : vector<1x128xf32> to vector<16x128xf32>
    %75 = arith.addf %72, %74 : vector<16x128xf32>
    %cst_80 = arith.constant 0.000000e+00 : f32
    %76 = vector.broadcast %cst_80 : f32 to vector<16x128xf32>
    %77 = arith.maximumf %75, %76 : vector<16x128xf32>
    %c0_81 = arith.constant 0 : index
    %c0_82 = arith.constant 0 : index
    %c0_83 = arith.constant 0 : index
    %78 = vector.load %arg5[%c0_81, %c0_82, %c0_83] : memref<1x16x128xf32, #tpu.memory_space<vmem>>, vector<1x16x128xf32>
    %79 = vector.shape_cast %78 : vector<1x16x128xf32> to vector<16x128xf32>
    %80 = vector.shape_cast %77 : vector<16x128xf32> to vector<1x16x128xf32>
    tpu.vector_store %arg5[%c0_81, %c0_82, %c0_83], %80 {strides = array<i32>} : memref<1x16x128xf32, #tpu.memory_space<vmem>>, vector<1x16x128xf32>,
    return
  }
  func.func @transform_0(%arg0: i32, %arg1: i32) -> (i32, i32, i32, i32) {
    %c0_i32 = arith.constant 0 : i32
    %c0_i32_0 = arith.constant 0 : i32
    %c0_i32_1 = arith.constant 0 : i32
    return %arg0, %c0_i32, %arg1, %c0_i32_0 : i32, i32, i32, i32
  }
  func.func @transform_1(%arg0: i32, %arg1: i32) -> (i32, i32, i32) {
    %c0_i32 = arith.constant 0 : i32
    %c0_i32_0 = arith.constant 0 : i32
    %c0_i32_1 = arith.constant 0 : i32
    %c0_i32_2 = arith.constant 0 : i32
    return %c0_i32, %c0_i32_0, %c0_i32_1 : i32, i32, i32
  }
  func.func @transform_2(%arg0: i32, %arg1: i32) -> (i32, i32) {
    %c0_i32 = arith.constant 0 : i32
    %c0_i32_0 = arith.constant 0 : i32
    %c0_i32_1 = arith.constant 0 : i32
    return %c0_i32, %c0_i32_0 : i32, i32
  }
  func.func @transform_3(%arg0: i32, %arg1: i32) -> (i32, i32, i32) {
    %c0_i32 = arith.constant 0 : i32
    %c0_i32_0 = arith.constant 0 : i32
    return %arg0, %arg1, %c0_i32 : i32, i32, i32
  }
}

</mosaic_0001>

<llo_original>
// kernel: tpu_custom_call.1
$region0: #{tpu_custom_call.1}
  #allocation0 [shape = 'u32[]', space=smem, size = 0x4, offset = 0x4, fixed_abs, tag = 'smem constant byte address 0x4 - core index']
  #allocation1 [shape = 'u32[72,128]{1,0:T(1,128)}', space=vmem, size = 0x9000, scoped, tag = 'internal scratch']
  #allocation2 [shape = 'f32[48,8]{1,0:T(8,128)}', space=vmem, size = 0x6000, scoped, tag = 'scratch operand']
  %s0 = inlined_call_operand.vmem [shape: f32[2,9,96,8], index: 0, kind: input, shape index: {}]
  %s1 = inlined_call_operand.vmem [shape: f32[9,8,128], index: 1, kind: input, shape index: {}]
  %s2 = inlined_call_operand.vmem [shape: f32[1,128], index: 2, kind: input, shape index: {}]
  %s3 = inlined_call_operand.hbm [shape: f32[2,48,128], index: 3, kind: output, shape index: {}]
  %s4 = sld [smem:[#allocation0]]
  $region83: #{tpu_custom_call.1} parent=0
    _
  %s6 = ssub.s32 1, %s4
  %s7 = scalar_select 0, %s6, %s4
  $region1: #{tpu_custom_call.1} parent=0
    #allocation3 [shape = 'u8[294912]{0}', space=vmem, size = 0x48000, scoped, tag = 'input window, operand 0']
    #allocation4 [shape = 'u8[16384]{0}', space=vmem, size = 0x4000, scoped, tag = 'output window, operand 0']
    #allocation5 [shape = 's32[2]{0}', space=sflag, size = 0x8, scoped, tag = 'scoped memory for tpu_custom_call.1']
    %8 = vsyncpa [#allocation5], 0
    %s9 = scalar_lea.sflag [#allocation5], 1
    %10 = vsyncpa %s9, 0
    loop: start=0, step=1, limit=8
    $region2: #{tpu_custom_call.1} parent=1 // loop_pre_header
      _
    $region3: #{tpu_custom_call.1} parent=1 // loop_header
      %s12 = sphi 0, %s16
      %p13 = scmp.ge.s32.totalorder %s12, 8
      %s19 = sphi 0, %s31
      %s20 = sphi 0, %s27
      %s21 = sphi 0, %s19
      %s22 = sphi 0, %s20
      %s23 = sphi 0, %s21
      %s24 = sphi 0, %s22
      %s36 = sphi 0, %s38
      %s39 = sphi 0, %s36
      %s40 = sphi 0, %s39
      %s56 = sphi 0, %s40
      %s60 = sphi 0, %s60
      %s62 = sphi 0, %s60
      %s63 = sphi 0, %s62
      %s77 = sphi 0, %s63
      %s81 = sphi 0, %s81
      %s83 = sphi 0, %s81
      %s84 = sphi 0, %s83
      %s98 = sphi 0, %s84
      %s106 = sphi 0, %s108
      %s109 = sphi 0, %s106
      %s110 = sphi 0, %s109
      %s126 = sphi 0, %s110
    $region4: #{tpu_custom_call.1} parent=1 // loop_header_branch
      %15 = sbr.rel (%p13) target = $region8
    $region5: #{tpu_custom_call.1} parent=1 // loop_body
      %s17 = ssub.s32 %s12, 1
      %s18 = ssub.s32 %s12, 2
      %s25 = sadd.s32 1, %s20
      %p26 = scmp.ge.s32.totalorder %s25, 3
      %s27 = scalar_select %p26, 0, %s25
      %s28 = sadd.s32 1, %s19
      %s29 = scalar_select %p26, %s28, %s19
      %p30 = scmp.ge.s32.totalorder %s29, 2
      %s31 = scalar_select %p30, 0, %s29
      %s32 = ssub.s32 %s19, %s31
      %s33 = ssub.s32 %s20, %s27
      %s34 = sor.u32 %s32, %s33
      %p35 = scmp.eq.s32.totalorder %s34, 0
      %s37 = sadd.s32 %s36, 1
      %s38 = scalar_select %p35, %s36, %s37
      %p41 = pneg %p35
      %p42 = scmp.eq.s32.totalorder %s12, 5
      %p43 = por %p41, %p42
      %p44 = scmp.ne.s32.totalorder %s36, %s39
      %p45 = scmp.eq.s32.totalorder %s12, 0
      %p46 = por %p44, %p45
      %p47 = scmp.ne.s32.totalorder %s36, %s39
      %p48 = scmp.eq.s32.totalorder %s17, 5
      %p49 = por %p47, %p48
      %p50 = scmp.ne.s32.totalorder %s39, %s40
      %p51 = scmp.eq.s32.totalorder %s17, 0
      %p52 = por %p50, %p51
      %p53 = scmp.ne.s32.totalorder %s39, %s40
      %p54 = scmp.eq.s32.totalorder %s18, 5
      %p55 = por %p53, %p54
      %p57 = scmp.ne.s32.totalorder %s40, %s56
      %p58 = scmp.eq.s32.totalorder %s18, 0
      %p59 = por %p57, %p58
      %s61 = sadd.s32 %s60, 1
      %p64 = scmp.eq.s32.totalorder %s12, 5
      %p65 = scmp.ne.s32.totalorder %s60, %s62
      %p66 = scmp.eq.s32.totalorder %s12, 0
      %p67 = por %p65, %p66
      %p68 = scmp.ne.s32.totalorder %s60, %s62
      %p69 = scmp.eq.s32.totalorder %s17, 5
      %p70 = por %p68, %p69
      %p71 = scmp.ne.s32.totalorder %s62, %s63
      %p72 = scmp.eq.s32.totalorder %s17, 0
      %p73 = por %p71, %p72
      %p74 = scmp.ne.s32.totalorder %s62, %s63
      %p75 = scmp.eq.s32.totalorder %s18, 5
      %p76 = por %p74, %p75
      %p78 = scmp.ne.s32.totalorder %s63, %s77
      %p79 = scmp.eq.s32.totalorder %s18, 0
      %p80 = por %p78, %p79
      %s82 = sadd.s32 %s81, 1
      %p85 = scmp.eq.s32.totalorder %s12, 5
      %p86 = scmp.ne.s32.totalorder %s81, %s83
      %p87 = scmp.eq.s32.totalorder %s12, 0
      %p88 = por %p86, %p87
      %p89 = scmp.ne.s32.totalorder %s81, %s83
      %p90 = scmp.eq.s32.totalorder %s17, 5
      %p91 = por %p89, %p90
      %p92 = scmp.ne.s32.totalorder %s83, %s84
      %p93 = scmp.eq.s32.totalorder %s17, 0
      %p94 = por %p92, %p93
      %p95 = scmp.ne.s32.totalorder %s83, %s84
      %p96 = scmp.eq.s32.totalorder %s18, 5
      %p97 = por %p95, %p96
      %p99 = scmp.ne.s32.totalorder %s84, %s98
      %p100 = scmp.eq.s32.totalorder %s18, 0
      %p101 = por %p99, %p100
      %s102 = ssub.s32 %s19, %s31
      %s103 = ssub.s32 %s20, %s27
      %s104 = sor.u32 %s102, %s103
      %p105 = scmp.eq.s32.totalorder %s104, 0
      %s107 = sadd.s32 %s106, 1
      %s108 = scalar_select %p105, %s106, %s107
      %p111 = pneg %p105
      %p112 = scmp.eq.s32.totalorder %s12, 5
      %p113 = por %p111, %p112
      %p114 = scmp.ne.s32.totalorder %s106, %s109
      %p115 = scmp.eq.s32.totalorder %s12, 0
      %p116 = por %p114, %p115
      %p117 = scmp.ne.s32.totalorder %s106, %s109
      %p118 = scmp.eq.s32.totalorder %s17, 5
      %p119 = por %p117, %p118
      %p120 = scmp.ne.s32.totalorder %s109, %s110
      %p121 = scmp.eq.s32.totalorder %s17, 0
      %p122 = por %p120, %p121
      %p123 = scmp.ne.s32.totalorder %s109, %s110
      %p124 = scmp.eq.s32.totalorder %s18, 5
      %p125 = por %p123, %p124
      %p127 = scmp.ne.s32.totalorder %s110, %s126
      %p128 = scmp.eq.s32.totalorder %s18, 0
      %p129 = por %p127, %p128
      %p130 = scmp.le.s32.totalorder 1, %s12
      %p131 = scmp.lt.s32.totalorder %s12, 7
      %p132 = pnand %p130, %p131
      %p133 = pneg %p132
      // Predicated region
      $region9: #{tpu_custom_call.1} parent=5 // pred_check
        _
      $region10: #{tpu_custom_call.1} parent=5 // pred_check_branch
        %135 = sbr.rel (%p132) target = $region12
      $region11: #{tpu_custom_call.1} parent=5 // pred_region
        %s136 = ssub.s32 %s12, 1
        // Predicated region
        $region13: #{tpu_custom_call.1} parent=11 // pred_check
          %p137 = pneg %p73
        $region14: #{tpu_custom_call.1} parent=11 // pred_check_branch
          %139 = sbr.rel (%p137) target = $region16
        $region15: #{tpu_custom_call.1} parent=11 // pred_region
          _
        $region16: #{tpu_custom_call.1} parent=11 // pred_fallthru
          _
        // Predicated region
        $region17: #{tpu_custom_call.1} parent=11 // pred_check
          %p140 = pneg %p94
        $region18: #{tpu_custom_call.1} parent=11 // pred_check_branch
          %142 = sbr.rel (%p140) target = $region20
        $region19: #{tpu_custom_call.1} parent=11 // pred_region
          _
        $region20: #{tpu_custom_call.1} parent=11 // pred_fallthru
          _
      $region12: #{tpu_custom_call.1} parent=5 // pred_fallthru
        _
      %p143 = scmp.lt.s32.totalorder %s12, 6
      // Predicated region
      $region21: #{tpu_custom_call.1} parent=5 // pred_check
        %p144 = pneg %p143
      $region22: #{tpu_custom_call.1} parent=5 // pred_check_branch
        %146 = sbr.rel (%p144) target = $region24
      $region23: #{tpu_custom_call.1} parent=5 // pred_region
        // Predicated region
        $region25: #{tpu_custom_call.1} parent=23 // pred_check
          %p147 = pneg %p46
        $region26: #{tpu_custom_call.1} parent=23 // pred_check_branch
          %149 = sbr.rel (%p147) target = $region28
        $region27: #{tpu_custom_call.1} parent=23 // pred_region
          %s150 = sand.u32 %s36, 1
          %s151 = sand.u32 %s36, 1
          %s152 = smul.addr %s151, 288
          %s153 = scalar_lea.vmem [#allocation3], %s152
          %s154 = smul.u32 4, %s20
          %s155 = smul.addr %s19, 108
          %s156 = sadd.s32 %s154, %s155
          %s157 = smul.addr %s156, 8
          %s158 = scalar_lea.vmem %s0, %s157
          // Predicated region
          $region29: #{tpu_custom_call.1} parent=27 // pred_check
            _
          $region30: #{tpu_custom_call.1} parent=27 // pred_check_branch
            %160 = sbr.rel (0) target = $region32
          $region31: #{tpu_custom_call.1} parent=27 // pred_region
            // Predicated region
            $region33: #{tpu_custom_call.1} parent=31 // pred_check
              _
            $region34: #{tpu_custom_call.1} parent=31 // pred_check_branch
              %162 = sbr.rel (0) target = $region36
            $region35: #{tpu_custom_call.1} parent=31 // pred_region
              // Predicated region
              $region48: #{tpu_custom_call.1} parent=35 // pred_check
                _
              $region49: #{tpu_custom_call.1} parent=35 // pred_check_branch
                %248 = sbr.rel (0) target = $region51
              $region50: #{tpu_custom_call.1} parent=35 // pred_region
                loop: start=0, step=1, limit=1
                $region52: #{tpu_custom_call.1} parent=50 // loop_pre_header
                  _
                $region53: #{tpu_custom_call.1} parent=50 // loop_header
                  %s250 = sphi 0, %s254
                  %p251 = scmp.ge.s32.totalorder %s250, 1
                  %s255 = sphi %s158, %s158
                  %s256 = sphi %s153, %s153
                $region54: #{tpu_custom_call.1} parent=50 // loop_header_branch
                  %253 = sbr.rel (%p251) target = $region58
                $region55: #{tpu_custom_call.1} parent=50 // loop_body
                  %v257 = vld [vmem:[%s255] sm:$0xff]
                  %258 = vst [vmem:[%s256] sm:$0xff] %v257
                  %v259 = vld [vmem:[%s255 + $0x8] sm:$0xff]
                  %260 = vst [vmem:[%s256 + $0x8] sm:$0xff] %v259
                  %v261 = vld [vmem:[%s255 + $0x10] sm:$0xff]
                  %262 = vst [vmem:[%s256 + $0x10] sm:$0xff] %v261
                  %v263 = vld [vmem:[%s255 + $0x18] sm:$0xff]
                  %264 = vst [vmem:[%s256 + $0x18] sm:$0xff] %v263
                  %v265 = vld [vmem:[%s255 + $0x60] sm:$0xff]
                  %266 = vst [vmem:[%s256 + $0x20] sm:$0xff] %v265
                  %v267 = vld [vmem:[%s255 + $0x68] sm:$0xff]
                  %268 = vst [vmem:[%s256 + $0x28] sm:$0xff] %v267
                  %v269 = vld [vmem:[%s255 + $0x70] sm:$0xff]
                  %270 = vst [vmem:[%s256 + $0x30] sm:$0xff] %v269
                  %v271 = vld [vmem:[%s255 + $0x78] sm:$0xff]
                  %272 = vst [vmem:[%s256 + $0x38] sm:$0xff] %v271
                  %v273 = vld [vmem:[%s255 + $0xc0] sm:$0xff]
                  %274 = vst [vmem:[%s256 + $0x40] sm:$0xff] %v273
                  %v275 = vld [vmem:[%s255 + $0xc8] sm:$0xff]
                  %276 = vst [vmem:[%s256 + $0x48] sm:$0xff] %v275
                  %v277 = vld [vmem:[%s255 + $0xd0] sm:$0xff]
                  %278 = vst [vmem:[%s256 + $0x50] sm:$0xff] %v277
                  %v279 = vld [vmem:[%s255 + $0xd8] sm:$0xff]
                  %280 = vst [vmem:[%s256 + $0x58] sm:$0xff] %v279
                  %v281 = vld [vmem:[%s255 + $0x120] sm:$0xff]
                  %282 = vst [vmem:[%s256 + $0x60] sm:$0xff] %v281
                  %v283 = vld [vmem:[%s255 + $0x128] sm:$0xff]
                  %284 = vst [vmem:[%s256 + $0x68] sm:$0xff] %v283
                  %v285 = vld [vmem:[%s255 + $0x130] sm:$0xff]
                  %286 = vst [vmem:[%s256 + $0x70] sm:$0xff] %v285
                  %v287 = vld [vmem:[%s255 + $0x138] sm:$0xff]
                  %288 = vst [vmem:[%s256 + $0x78] sm:$0xff] %v287
                  %v289 = vld [vmem:[%s255 + $0x180] sm:$0xff]
                  %290 = vst [vmem:[%s256 + $0x80] sm:$0xff] %v289
                  %v291 = vld [vmem:[%s255 + $0x188] sm:$0xff]
                  %292 = vst [vmem:[%s256 + $0x88] sm:$0xff] %v291
                  %v293 = vld [vmem:[%s255 + $0x190] sm:$0xff]
                  %294 = vst [vmem:[%s256 + $0x90] sm:$0xff] %v293
                  %v295 = vld [vmem:[%s255 + $0x198] sm:$0xff]
                  %296 = vst [vmem:[%s256 + $0x98] sm:$0xff] %v295
                  %v297 = vld [vmem:[%s255 + $0x1e0] sm:$0xff]
                  %298 = vst [vmem:[%s256 + $0xa0] sm:$0xff] %v297
                  %v299 = vld [vmem:[%s255 + $0x1e8] sm:$0xff]
                  %300 = vst [vmem:[%s256 + $0xa8] sm:$0xff] %v299
                  %v301 = vld [vmem:[%s255 + $0x1f0] sm:$0xff]
                  %302 = vst [vmem:[%s256 + $0xb0] sm:$0xff] %v301
                  %v303 = vld [vmem:[%s255 + $0x1f8] sm:$0xff]
                  %304 = vst [vmem:[%s256 + $0xb8] sm:$0xff] %v303
                  %v305 = vld [vmem:[%s255 + $0x240] sm:$0xff]
                  %306 = vst [vmem:[%s256 + $0xc0] sm:$0xff] %v305
                  %v307 = vld [vmem:[%s255 + $0x248] sm:$0xff]
                  %308 = vst [vmem:[%s256 + $0xc8] sm:$0xff] %v307
                  %v309 = vld [vmem:[%s255 + $0x250] sm:$0xff]
                  %310 = vst [vmem:[%s256 + $0xd0] sm:$0xff] %v309
                  %v311 = vld [vmem:[%s255 + $0x258] sm:$0xff]
                  %312 = vst [vmem:[%s256 + $0xd8] sm:$0xff] %v311
                  %v313 = vld [vmem:[%s255 + $0x2a0] sm:$0xff]
                  %314 = vst [vmem:[%s256 + $0xe0] sm:$0xff] %v313
                  %v315 = vld [vmem:[%s255 + $0x2a8] sm:$0xff]
                  %316 = vst [vmem:[%s256 + $0xe8] sm:$0xff] %v315
                  %v317 = vld [vmem:[%s255 + $0x2b0] sm:$0xff]
                  %318 = vst [vmem:[%s256 + $0xf0] sm:$0xff] %v317
                  %v319 = vld [vmem:[%s255 + $0x2b8] sm:$0xff]
                  %320 = vst [vmem:[%s256 + $0xf8] sm:$0xff] %v319
                  %v321 = vld [vmem:[%s255 + $0x300] sm:$0xff]
                  %322 = vst [vmem:[%s256 + $0x100] sm:$0xff] %v321
                  %v323 = vld [vmem:[%s255 + $0x308] sm:$0xff]
                  %324 = vst [vmem:[%s256 + $0x108] sm:$0xff] %v323
                  %v325 = vld [vmem:[%s255 + $0x310] sm:$0xff]
                  %326 = vst [vmem:[%s256 + $0x110] sm:$0xff] %v325
                  %v327 = vld [vmem:[%s255 + $0x318] sm:$0xff]
                  %328 = vst [vmem:[%s256 + $0x118] sm:$0xff] %v327
                $region56: #{tpu_custom_call.1} parent=50 // loop_footer
                  %s254 = sadd.s32 1, %s250
                $region57: #{tpu_custom_call.1} parent=50 // loop_footer_branch
                  %249 = sbr.rel target = $region53
                $region58: #{tpu_custom_call.1} parent=50 // loop_exit
                  _
              $region51: #{tpu_custom_call.1} parent=35 // pred_fallthru
                _
              // Predicated region
              $region59: #{tpu_custom_call.1} parent=35 // pred_check
                _
              $region60: #{tpu_custom_call.1} parent=35 // pred_check_branch
                %330 = sbr.rel target = $region62
              $region61: #{tpu_custom_call.1} parent=35 // pred_region
                _
              $region62: #{tpu_custom_call.1} parent=35 // pred_fallthru
                _
            $region36: #{tpu_custom_call.1} parent=31 // pred_fallthru
              _
            // Predicated region
            $region37: #{tpu_custom_call.1} parent=31 // pred_check
              _
            $region38: #{tpu_custom_call.1} parent=31 // pred_check_branch
              %164 = sbr.rel target = $region40
            $region39: #{tpu_custom_call.1} parent=31 // pred_region
              %s166 = ssub.s32 256, 1
              loop: start=0, step=1, limit=1
              $region41: #{tpu_custom_call.1} parent=39 // loop_pre_header
                _
              $region42: #{tpu_custom_call.1} parent=39 // loop_header
                %s168 = sphi 0, %s172
                %p169 = scmp.ge.s32.totalorder %s168, 1
                %s173 = sphi %s158, %s158
                %s174 = sphi %s153, %s153
              $region43: #{tpu_custom_call.1} parent=39 // loop_header_branch
                %171 = sbr.rel (%p169) target = $region47
              $region44: #{tpu_custom_call.1} parent=39 // loop_body
                %v175 = vld [vmem:[%s173] sm:%s166]
                %176 = vst [vmem:[%s174] sm:%s166] %v175
                %v177 = vld [vmem:[%s173 + $0x8] sm:%s166]
                %178 = vst [vmem:[%s174 + $0x8] sm:%s166] %v177
                %v179 = vld [vmem:[%s173 + $0x10] sm:%s166]
                %180 = vst [vmem:[%s174 + $0x10] sm:%s166] %v179
                %v181 = vld [vmem:[%s173 + $0x18] sm:%s166]
                %182 = vst [vmem:[%s174 + $0x18] sm:%s166] %v181
                %v183 = vld [vmem:[%s173 + $0x60] sm:%s166]
                %184 = vst [vmem:[%s174 + $0x20] sm:%s166] %v183
                %v185 = vld [vmem:[%s173 + $0x68] sm:%s166]
                %186 = vst [vmem:[%s174 + $0x28] sm:%s166] %v185
                %v187 = vld [vmem:[%s173 + $0x70] sm:%s166]
                %188 = vst [vmem:[%s174 + $0x30] sm:%s166] %v187
                %v189 = vld [vmem:[%s173 + $0x78] sm:%s166]
                %190 = vst [vmem:[%s174 + $0x38] sm:%s166] %v189
                %v191 = vld [vmem:[%s173 + $0xc0] sm:%s166]
                %192 = vst [vmem:[%s174 + $0x40] sm:%s166] %v191
                %v193 = vld [vmem:[%s173 + $0xc8] sm:%s166]
                %194 = vst [vmem:[%s174 + $0x48] sm:%s166] %v193
                %v195 = vld [vmem:[%s173 + $0xd0] sm:%s166]
                %196 = vst [vmem:[%s174 + $0x50] sm:%s166] %v195
                %v197 = vld [vmem:[%s173 + $0xd8] sm:%s166]
                %198 = vst [vmem:[%s174 + $0x58] sm:%s166] %v197
                %v199 = vld [vmem:[%s173 + $0x120] sm:%s166]
                %200 = vst [vmem:[%s174 + $0x60] sm:%s166] %v199
                %v201 = vld [vmem:[%s173 + $0x128] sm:%s166]
                %202 = vst [vmem:[%s174 + $0x68] sm:%s166] %v201
                %v203 = vld [vmem:[%s173 + $0x130] sm:%s166]
                %204 = vst [vmem:[%s174 + $0x70] sm:%s166] %v203
                %v205 = vld [vmem:[%s173 + $0x138] sm:%s166]
                %206 = vst [vmem:[%s174 + $0x78] sm:%s166] %v205
                %v207 = vld [vmem:[%s173 + $0x180] sm:%s166]
                %208 = vst [vmem:[%s174 + $0x80] sm:%s166] %v207
                %v209 = vld [vmem:[%s173 + $0x188] sm:%s166]
                %210 = vst [vmem:[%s174 + $0x88] sm:%s166] %v209
                %v211 = vld [vmem:[%s173 + $0x190] sm:%s166]
                %212 = vst [vmem:[%s174 + $0x90] sm:%s166] %v211
                %v213 = vld [vmem:[%s173 + $0x198] sm:%s166]
                %214 = vst [vmem:[%s174 + $0x98] sm:%s166] %v213
                %v215 = vld [vmem:[%s173 + $0x1e0] sm:%s166]
                %216 = vst [vmem:[%s174 + $0xa0] sm:%s166] %v215
                %v217 = vld [vmem:[%s173 + $0x1e8] sm:%s166]
                %218 = vst [vmem:[%s174 + $0xa8] sm:%s166] %v217
                %v219 = vld [vmem:[%s173 + $0x1f0] sm:%s166]
                %220 = vst [vmem:[%s174 + $0xb0] sm:%s166] %v219
                %v221 = vld [vmem:[%s173 + $0x1f8] sm:%s166]
                %222 = vst [vmem:[%s174 + $0xb8] sm:%s166] %v221
                %v223 = vld [vmem:[%s173 + $0x240] sm:%s166]
                %224 = vst [vmem:[%s174 + $0xc0] sm:%s166] %v223
                %v225 = vld [vmem:[%s173 + $0x248] sm:%s166]
                %226 = vst [vmem:[%s174 + $0xc8] sm:%s166] %v225
                %v227 = vld [vmem:[%s173 + $0x250] sm:%s166]
                %228 = vst [vmem:[%s174 + $0xd0] sm:%s166] %v227
                %v229 = vld [vmem:[%s173 + $0x258] sm:%s166]
                %230 = vst [vmem:[%s174 + $0xd8] sm:%s166] %v229
                %v231 = vld [vmem:[%s173 + $0x2a0] sm:%s166]
                %232 = vst [vmem:[%s174 + $0xe0] sm:%s166] %v231
                %v233 = vld [vmem:[%s173 + $0x2a8] sm:%s166]
                %234 = vst [vmem:[%s174 + $0xe8] sm:%s166] %v233
                %v235 = vld [vmem:[%s173 + $0x2b0] sm:%s166]
                %236 = vst [vmem:[%s174 + $0xf0] sm:%s166] %v235
                %v237 = vld [vmem:[%s173 + $0x2b8] sm:%s166]
                %238 = vst [vmem:[%s174 + $0xf8] sm:%s166] %v237
                %v239 = vld [vmem:[%s173 + $0x300] sm:%s166]
                %240 = vst [vmem:[%s174 + $0x100] sm:%s166] %v239
                %v241 = vld [vmem:[%s173 + $0x308] sm:%s166]
                %242 = vst [vmem:[%s174 + $0x108] sm:%s166] %v241
                %v243 = vld [vmem:[%s173 + $0x310] sm:%s166]
                %244 = vst [vmem:[%s174 + $0x110] sm:%s166] %v243
                %v245 = vld [vmem:[%s173 + $0x318] sm:%s166]
                %246 = vst [vmem:[%s174 + $0x118] sm:%s166] %v245
              $region45: #{tpu_custom_call.1} parent=39 // loop_footer
                %s172 = sadd.s32 1, %s168
              $region46: #{tpu_custom_call.1} parent=39 // loop_footer_branch
                %167 = sbr.rel target = $region42
              $region47: #{tpu_custom_call.1} parent=39 // loop_exit
                _
            $region40: #{tpu_custom_call.1} parent=31 // pred_fallthru
              _
          $region32: #{tpu_custom_call.1} parent=27 // pred_fallthru
            _
          %331 = vnop
        $region28: #{tpu_custom_call.1} parent=23 // pred_fallthru
          _
      $region24: #{tpu_custom_call.1} parent=5 // pred_fallthru
        _
      %p332 = scmp.le.s32.totalorder 1, %s12
      %p333 = scmp.lt.s32.totalorder %s12, 7
      %p334 = pnand %p332, %p333
      %p335 = pneg %p334
      // Predicated region
      $region63: #{tpu_custom_call.1} parent=5 // pred_check
        _
      $region64: #{tpu_custom_call.1} parent=5 // pred_check_branch
        %337 = sbr.rel (%p334) target = $region66
      $region65: #{tpu_custom_call.1} parent=5 // pred_region
        %s338 = ssub.s32 %s12, 1
        %s339 = sand.u32 %s39, 1
        %s340 = sand.u32 %s39, 1
        %s341 = smul.addr %s340, 288
        %s342 = scalar_lea.vmem [#allocation3], %s341
        // Predicated region
        $region67: #{tpu_custom_call.1} parent=65 // pred_check
          %p343 = pneg %p52
        $region68: #{tpu_custom_call.1} parent=65 // pred_check_branch
          %345 = sbr.rel (%p343) target = $region70
        $region69: #{tpu_custom_call.1} parent=65 // pred_region
          _
        $region70: #{tpu_custom_call.1} parent=65 // pred_fallthru
          _
        %s346 = sand.u32 %s39, 1
        %s347 = sand.u32 %s39, 1
        %s348 = smul.addr %s347, 288
        %s349 = scalar_lea.vmem [#allocation3], %s348
        %p350 = pneg %p52
        %p351 = pneg %p49
        %p352 = pneg %p73
        %p353 = pneg %p70
        %p354 = pneg %p94
        %p355 = pneg %p91
        %p356 = pneg %p122
        %p357 = pneg %p119
        %s358 = sand.u32 %s109, 1
        %s359 = scalar_lea.sflag [#allocation5], %s358
        %s360 = sand.u32 %s109, 1
        %s361 = smul.addr %s360, 16
        %s362 = scalar_lea.vmem [#allocation4], %s361
        %s363 = smul.u32 4, %s22
        %s364 = smul.u32 2, %s22
        %vm365 = vcmask 64512
        %366 = vst.msk [vmem:[#allocation2] sm:$0xff] %vm365, 0.0
        %v367 = vld [vmem:[%s342] sm:$0xff]
        %v368 = vld [vmem:[%s342 + $0x8] sm:$0xff]
        %v369 = vld [vmem:[%s342 + $0x10] sm:$0xff]
        %v370 = vld [vmem:[%s342 + $0x18] sm:$0xff]
        %s371 = scalar_lea.vmem %s342, 32 [#allocation3]
        %v372 = vld [vmem:[%s371] sm:$0xff]
        %v373 = vld [vmem:[%s371 + $0x8] sm:$0xff]
        %v374 = vld [vmem:[%s371 + $0x10] sm:$0xff]
        %v375 = vld [vmem:[%s371 + $0x18] sm:$0xff]
        %v376 = vmax.f32 %v367, %v372
        %v377 = vmax.f32 %v368, %v373
        %v378 = vmax.f32 %v369, %v374
        %v379 = vmax.f32 %v370, %v375
        %s380 = scalar_lea.vmem %s342, 64 [#allocation3]
        %v381 = vld [vmem:[%s380] sm:$0xff]
        %v382 = vld [vmem:[%s380 + $0x8] sm:$0xff]
        %v383 = vld [vmem:[%s380 + $0x10] sm:$0xff]
        %v384 = vld [vmem:[%s380 + $0x18] sm:$0xff]
        %v385 = vmax.f32 %v376, %v381
        %v386 = vmax.f32 %v377, %v382
        %v387 = vmax.f32 %v378, %v383
        %v388 = vmax.f32 %v379, %v384
        %s389 = scalar_lea.vmem %s342, 96 [#allocation3]
        %v390 = vld [vmem:[%s389] sm:$0xff]
        %v391 = vld [vmem:[%s389 + $0x8] sm:$0xff]
        %v392 = vld [vmem:[%s389 + $0x10] sm:$0xff]
        %v393 = vld [vmem:[%s389 + $0x18] sm:$0xff]
        %v394 = vmax.f32 %v385, %v390
        %v395 = vmax.f32 %v386, %v391
        %v396 = vmax.f32 %v387, %v392
        %v397 = vmax.f32 %v388, %v393
        %s398 = scalar_lea.vmem %s342, 128 [#allocation3]
        %v399 = vld [vmem:[%s398] sm:$0xff]
        %v400 = vld [vmem:[%s398 + $0x8] sm:$0xff]
        %v401 = vld [vmem:[%s398 + $0x10] sm:$0xff]
        %v402 = vld [vmem:[%s398 + $0x18] sm:$0xff]
        %v403 = vmax.f32 %v394, %v399
        %v404 = vmax.f32 %v395, %v400
        %v405 = vmax.f32 %v396, %v401
        %v406 = vmax.f32 %v397, %v402
        %s407 = scalar_lea.vmem %s342, 160 [#allocation3]
        %v408 = vld [vmem:[%s407] sm:$0xff]
        %v409 = vld [vmem:[%s407 + $0x8] sm:$0xff]
        %v410 = vld [vmem:[%s407 + $0x10] sm:$0xff]
        %v411 = vld [vmem:[%s407 + $0x18] sm:$0xff]
        %v412 = vmax.f32 %v403, %v408
        %v413 = vmax.f32 %v404, %v409
        %v414 = vmax.f32 %v405, %v410
        %v415 = vmax.f32 %v406, %v411
        %s416 = scalar_lea.vmem %s342, 192 [#allocation3]
        %v417 = vld [vmem:[%s416] sm:$0xff]
        %v418 = vld [vmem:[%s416 + $0x8] sm:$0xff]
        %v419 = vld [vmem:[%s416 + $0x10] sm:$0xff]
        %v420 = vld [vmem:[%s416 + $0x18] sm:$0xff]
        %v421 = vmax.f32 %v412, %v417
        %v422 = vmax.f32 %v413, %v418
        %v423 = vmax.f32 %v414, %v419
        %v424 = vmax.f32 %v415, %v420
        %s425 = scalar_lea.vmem %s342, 224 [#allocation3]
        %v426 = vld [vmem:[%s425] sm:$0xff]
        %v427 = vld [vmem:[%s425 + $0x8] sm:$0xff]
        %v428 = vld [vmem:[%s425 + $0x10] sm:$0xff]
        %v429 = vld [vmem:[%s425 + $0x18] sm:$0xff]
        %v430 = vmax.f32 %v421, %v426
        %v431 = vmax.f32 %v422, %v427
        %v432 = vmax.f32 %v423, %v428
        %v433 = vmax.f32 %v424, %v429
        %s434 = scalar_lea.vmem %s342, 256 [#allocation3]
        %v435 = vld [vmem:[%s434] sm:$0xff]
        %v436 = vld [vmem:[%s434 + $0x8] sm:$0xff]
        %v437 = vld [vmem:[%s434 + $0x10] sm:$0xff]
        %v438 = vld [vmem:[%s434 + $0x18] sm:$0xff]
        %v439 = vmax.f32 %v430, %v435
        %v440 = vmax.f32 %v431, %v436
        %v441 = vmax.f32 %v432, %v437
        %v442 = vmax.f32 %v433, %v438
        %443 = vst.msk [vmem:[#allocation2 + $0x8] sm:$0xff] %vm365, %v439
        %444 = vst.msk [vmem:[#allocation2 + $0x10] sm:$0xff] %vm365, %v440
        %445 = vst.msk [vmem:[#allocation2 + $0x18] sm:$0xff] %vm365, %v441
        %446 = vst.msk [vmem:[#allocation2 + $0x20] sm:$0xff] %vm365, %v442
        %v447 = vld [vmem:[#allocation2 + $0x7] sm:$0xff]
        %v448 = vld [vmem:[#allocation2 + $0xf] sm:$0xff]
        %v449 = vld [vmem:[%s1] sm:$0xff]
        %v450 = vld [vmem:[#allocation2 + $0x8] sm:$0xff]
        %v451 = vld [vmem:[#allocation2 + $0x10] sm:$0xff]
        %s452 = scalar_lea.vmem %s1, 8
        %v453 = vld [vmem:[%s452] sm:$0xff]
        %v455 = vsel %vm365, %v450, 0
        %v458 = vsel %vm365, %v451, 0
        %460 = vmatpush.msra.mxu0 0.0
        %461 = vmatpush.msra.mxu0 0.0
        %462 = vmatpush.msra.mxu0 0.0
        %463 = vmatpush.msra.mxu0 0.0
        %464 = vmatpush.msra.mxu0 0.0
        %465 = vmatpush.msra.mxu0 0.0
        %466 = vmatpush.msra.mxu0 0.0
        %467 = vmatpush.msra.mxu0 0.0
        %468 = vmatpush.msra.mxu0 0.0
        %469 = vmatpush.msra.mxu0 0.0
        %470 = vmatpush.msra.mxu0 0.0
        %471 = vmatpush.msra.mxu0 0.0
        %472 = vmatpush.msra.mxu0 0.0
        %473 = vmatpush.msra.mxu0 0.0
        %474 = vmatpush.msra.mxu0 0.0
        %475 = vmatpush.msra.mxu0 %v453
        %476 = vmatmul.f32.gmra.mxu0 %v455
        %v477 = vpop.f32.mrf.mxu0
        %v478 = vadd.f32 0.0, %v477
        %479 = vmatmul.f32.gmra.mxu0 %v458
        %v480 = vpop.f32.mrf.mxu0
        %v481 = vadd.f32 0.0, %v480
        %482 = vdwg.mxu0
        %v484 = vsel %vm365, %v447, 0
        %v487 = vsel %vm365, %v448, 0
        %489 = vmatpush.msra.mxu0 0.0
        %490 = vmatpush.msra.mxu0 0.0
        %491 = vmatpush.msra.mxu0 0.0
        %492 = vmatpush.msra.mxu0 0.0
        %493 = vmatpush.msra.mxu0 0.0
        %494 = vmatpush.msra.mxu0 0.0
        %495 = vmatpush.msra.mxu0 0.0
        %496 = vmatpush.msra.mxu0 0.0
        %497 = vmatpush.msra.mxu0 0.0
        %498 = vmatpush.msra.mxu0 0.0
        %499 = vmatpush.msra.mxu0 0.0
        %500 = vmatpush.msra.mxu0 0.0
        %501 = vmatpush.msra.mxu0 0.0
        %502 = vmatpush.msra.mxu0 0.0
        %503 = vmatpush.msra.mxu0 0.0
        %504 = vmatpush.msra.mxu0 %v449
        %505 = vmatmul.f32.gmra.mxu0 %v484
        %v506 = vpop.f32.mrf.mxu0
        %v507 = vadd.f32 %v478, %v506
        %508 = vmatmul.f32.gmra.mxu0 %v487
        %v509 = vpop.f32.mrf.mxu0
        %v510 = vadd.f32 %v481, %v509
        %511 = vdwg.mxu0
        %v512 = vld [vmem:[#allocation2 + $0x9] sm:$0xff]
        %v513 = vld [vmem:[#allocation2 + $0x11] sm:$0xff]
        %s514 = scalar_lea.vmem %s1, 16
        %v515 = vld [vmem:[%s514] sm:$0xff]
        %v517 = vsel %vm365, %v512, 0
        %v520 = vsel %vm365, %v513, 0
        %522 = vmatpush.msra.mxu0 0.0
        %523 = vmatpush.msra.mxu0 0.0
        %524 = vmatpush.msra.mxu0 0.0
        %525 = vmatpush.msra.mxu0 0.0
        %526 = vmatpush.msra.mxu0 0.0
        %527 = vmatpush.msra.mxu0 0.0
        %528 = vmatpush.msra.mxu0 0.0
        %529 = vmatpush.msra.mxu0 0.0
        %530 = vmatpush.msra.mxu0 0.0
        %531 = vmatpush.msra.mxu0 0.0
        %532 = vmatpush.msra.mxu0 0.0
        %533 = vmatpush.msra.mxu0 0.0
        %534 = vmatpush.msra.mxu0 0.0
        %535 = vmatpush.msra.mxu0 0.0
        %536 = vmatpush.msra.mxu0 0.0
        %537 = vmatpush.msra.mxu0 %v515
        %538 = vmatmul.f32.gmra.mxu0 %v517
        %v539 = vpop.f32.mrf.mxu0
        %v540 = vadd.f32 0.0, %v539
        %541 = vmatmul.f32.gmra.mxu0 %v520
        %v542 = vpop.f32.mrf.mxu0
        %v543 = vadd.f32 0.0, %v542
        %544 = vdwg.mxu0
        %v545 = vadd.f32 %v507, %v540
        %v546 = vadd.f32 %v510, %v543
        %v547 = vld [vmem:[#allocation2 + $0xf] sm:$0xff]
        %v548 = vld [vmem:[#allocation2 + $0x17] sm:$0xff]
        %s549 = scalar_lea.vmem %s1, 24
        %v550 = vld [vmem:[%s549] sm:$0xff]
        %v552 = vsel %vm365, %v547, 0
        %v555 = vsel %vm365, %v548, 0
        %557 = vmatpush.msra.mxu0 0.0
        %558 = vmatpush.msra.mxu0 0.0
        %559 = vmatpush.msra.mxu0 0.0
        %560 = vmatpush.msra.mxu0 0.0
        %561 = vmatpush.msra.mxu0 0.0
        %562 = vmatpush.msra.mxu0 0.0
        %563 = vmatpush.msra.mxu0 0.0
        %564 = vmatpush.msra.mxu0 0.0
        %565 = vmatpush.msra.mxu0 0.0
        %566 = vmatpush.msra.mxu0 0.0
        %567 = vmatpush.msra.mxu0 0.0
        %568 = vmatpush.msra.mxu0 0.0
        %569 = vmatpush.msra.mxu0 0.0
        %570 = vmatpush.msra.mxu0 0.0
        %571 = vmatpush.msra.mxu0 0.0
        %572 = vmatpush.msra.mxu0 %v550
        %573 = vmatmul.f32.gmra.mxu0 %v552
        %v574 = vpop.f32.mrf.mxu0
        %v575 = vadd.f32 0.0, %v574
        %576 = vmatmul.f32.gmra.mxu0 %v555
        %v577 = vpop.f32.mrf.mxu0
        %v578 = vadd.f32 0.0, %v577
        %579 = vdwg.mxu0
        %v580 = vadd.f32 %v545, %v575
        %v581 = vadd.f32 %v546, %v578
        %v582 = vld [vmem:[#allocation2 + $0x10] sm:$0xff]
        %v583 = vld [vmem:[#allocation2 + $0x18] sm:$0xff]
        %s584 = scalar_lea.vmem %s1, 32
        %v585 = vld [vmem:[%s584] sm:$0xff]
        %v587 = vsel %vm365, %v582, 0
        %v590 = vsel %vm365, %v583, 0
        %592 = vmatpush.msra.mxu0 0.0
        %593 = vmatpush.msra.mxu0 0.0
        %594 = vmatpush.msra.mxu0 0.0
        %595 = vmatpush.msra.mxu0 0.0
        %596 = vmatpush.msra.mxu0 0.0
        %597 = vmatpush.msra.mxu0 0.0
        %598 = vmatpush.msra.mxu0 0.0
        %599 = vmatpush.msra.mxu0 0.0
        %600 = vmatpush.msra.mxu0 0.0
        %601 = vmatpush.msra.mxu0 0.0
        %602 = vmatpush.msra.mxu0 0.0
        %603 = vmatpush.msra.mxu0 0.0
        %604 = vmatpush.msra.mxu0 0.0
        %605 = vmatpush.msra.mxu0 0.0
        %606 = vmatpush.msra.mxu0 0.0
        %607 = vmatpush.msra.mxu0 %v585
        %608 = vmatmul.f32.gmra.mxu0 %v587
        %v609 = vpop.f32.mrf.mxu0
        %v610 = vadd.f32 0.0, %v609
        %611 = vmatmul.f32.gmra.mxu0 %v590
        %v612 = vpop.f32.mrf.mxu0
        %v613 = vadd.f32 0.0, %v612
        %614 = vdwg.mxu0
        %v615 = vadd.f32 %v580, %v610
        %v616 = vadd.f32 %v581, %v613
        %v617 = vld [vmem:[#allocation2 + $0x11] sm:$0xff]
        %v618 = vld [vmem:[#allocation2 + $0x19] sm:$0xff]
        %s619 = scalar_lea.vmem %s1, 40
        %v620 = vld [vmem:[%s619] sm:$0xff]
        %v622 = vsel %vm365, %v617, 0
        %v625 = vsel %vm365, %v618, 0
        %627 = vmatpush.msra.mxu0 0.0
        %628 = vmatpush.msra.mxu0 0.0
        %629 = vmatpush.msra.mxu0 0.0
        %630 = vmatpush.msra.mxu0 0.0
        %631 = vmatpush.msra.mxu0 0.0
        %632 = vmatpush.msra.mxu0 0.0
        %633 = vmatpush.msra.mxu0 0.0
        %634 = vmatpush.msra.mxu0 0.0
        %635 = vmatpush.msra.mxu0 0.0
        %636 = vmatpush.msra.mxu0 0.0
        %637 = vmatpush.msra.mxu0 0.0
        %638 = vmatpush.msra.mxu0 0.0
        %639 = vmatpush.msra.mxu0 0.0
        %640 = vmatpush.msra.mxu0 0.0
        %641 = vmatpush.msra.mxu0 0.0
        %642 = vmatpush.msra.mxu0 %v620
        %643 = vmatmul.f32.gmra.mxu0 %v622
        %v644 = vpop.f32.mrf.mxu0
        %v645 = vadd.f32 0.0, %v644
        %646 = vmatmul.f32.gmra.mxu0 %v625
        %v647 = vpop.f32.mrf.mxu0
        %v648 = vadd.f32 0.0, %v647
        %649 = vdwg.mxu0
        %v650 = vadd.f32 %v615, %v645
        %v651 = vadd.f32 %v616, %v648
        %v652 = vld [vmem:[#allocation2 + $0x17] sm:$0xff]
        %v653 = vld [vmem:[#allocation2 + $0x1f] sm:$0xff]
        %s654 = scalar_lea.vmem %s1, 48
        %v655 = vld [vmem:[%s654] sm:$0xff]
        %v657 = vsel %vm365, %v652, 0
        %v660 = vsel %vm365, %v653, 0
        %662 = vmatpush.msra.mxu0 0.0
        %663 = vmatpush.msra.mxu0 0.0
        %664 = vmatpush.msra.mxu0 0.0
        %665 = vmatpush.msra.mxu0 0.0
        %666 = vmatpush.msra.mxu0 0.0
        %667 = vmatpush.msra.mxu0 0.0
        %668 = vmatpush.msra.mxu0 0.0
        %669 = vmatpush.msra.mxu0 0.0
        %670 = vmatpush.msra.mxu0 0.0
        %671 = vmatpush.msra.mxu0 0.0
        %672 = vmatpush.msra.mxu0 0.0
        %673 = vmatpush.msra.mxu0 0.0
        %674 = vmatpush.msra.mxu0 0.0
        %675 = vmatpush.msra.mxu0 0.0
        %676 = vmatpush.msra.mxu0 0.0
        %677 = vmatpush.msra.mxu0 %v655
        %678 = vmatmul.f32.gmra.mxu0 %v657
        %v679 = vpop.f32.mrf.mxu0
        %v680 = vadd.f32 0.0, %v679
        %681 = vmatmul.f32.gmra.mxu0 %v660
        %v682 = vpop.f32.mrf.mxu0
        %v683 = vadd.f32 0.0, %v682
        %684 = vdwg.mxu0
        %v685 = vadd.f32 %v650, %v680
        %v686 = vadd.f32 %v651, %v683
        %v687 = vld [vmem:[#allocation2 + $0x18] sm:$0xff]
        %v688 = vld [vmem:[#allocation2 + $0x20] sm:$0xff]
        %s689 = scalar_lea.vmem %s1, 56
        %v690 = vld [vmem:[%s689] sm:$0xff]
        %v692 = vsel %vm365, %v687, 0
        %v695 = vsel %vm365, %v688, 0
        %697 = vmatpush.msra.mxu0 0.0
        %698 = vmatpush.msra.mxu0 0.0
        %699 = vmatpush.msra.mxu0 0.0
        %700 = vmatpush.msra.mxu0 0.0
        %701 = vmatpush.msra.mxu0 0.0
        %702 = vmatpush.msra.mxu0 0.0
        %703 = vmatpush.msra.mxu0 0.0
        %704 = vmatpush.msra.mxu0 0.0
        %705 = vmatpush.msra.mxu0 0.0
        %706 = vmatpush.msra.mxu0 0.0
        %707 = vmatpush.msra.mxu0 0.0
        %708 = vmatpush.msra.mxu0 0.0
        %709 = vmatpush.msra.mxu0 0.0
        %710 = vmatpush.msra.mxu0 0.0
        %711 = vmatpush.msra.mxu0 0.0
        %712 = vmatpush.msra.mxu0 %v690
        %713 = vmatmul.f32.gmra.mxu0 %v692
        %v714 = vpop.f32.mrf.mxu0
        %v715 = vadd.f32 0.0, %v714
        %716 = vmatmul.f32.gmra.mxu0 %v695
        %v717 = vpop.f32.mrf.mxu0
        %v718 = vadd.f32 0.0, %v717
        %719 = vdwg.mxu0
        %v720 = vadd.f32 %v685, %v715
        %v721 = vadd.f32 %v686, %v718
        %v722 = vld [vmem:[#allocation2 + $0x19] sm:$0xff]
        %v723 = vld [vmem:[#allocation2 + $0x21] sm:$0xff]
        %s724 = scalar_lea.vmem %s1, 64
        %v725 = vld [vmem:[%s724] sm:$0xff]
        %v727 = vsel %vm365, %v722, 0
        %v730 = vsel %vm365, %v723, 0
        %732 = vmatpush.msra.mxu0 0.0
        %733 = vmatpush.msra.mxu0 0.0
        %734 = vmatpush.msra.mxu0 0.0
        %735 = vmatpush.msra.mxu0 0.0
        %736 = vmatpush.msra.mxu0 0.0
        %737 = vmatpush.msra.mxu0 0.0
        %738 = vmatpush.msra.mxu0 0.0
        %739 = vmatpush.msra.mxu0 0.0
        %740 = vmatpush.msra.mxu0 0.0
        %741 = vmatpush.msra.mxu0 0.0
        %742 = vmatpush.msra.mxu0 0.0
        %743 = vmatpush.msra.mxu0 0.0
        %744 = vmatpush.msra.mxu0 0.0
        %745 = vmatpush.msra.mxu0 0.0
        %746 = vmatpush.msra.mxu0 0.0
        %747 = vmatpush.msra.mxu0 %v725
        %748 = vmatmul.f32.gmra.mxu0 %v727
        %v749 = vpop.f32.mrf.mxu0
        %v750 = vadd.f32 0.0, %v749
        %751 = vmatmul.f32.gmra.mxu0 %v730
        %v752 = vpop.f32.mrf.mxu0
        %v753 = vadd.f32 0.0, %v752
        %754 = vdwg.mxu0
        %v755 = vadd.f32 %v720, %v750
        %v756 = vadd.f32 %v721, %v753
        %v757 = vld [vmem:[%s2] sm:$0x1]
        %v759 = vperm.slane %v757, 0
        %v761 = vadd.f32 %v755, %v759
        %v762 = vadd.f32 %v756, %v759
        %v763 = vmax.f32 %v761, 0.0
        %v764 = vmax.f32 %v762, 0.0
        %765 = vst [vmem:[%s362] sm:$0xff] %v763
        %766 = vst [vmem:[%s362 + $0x8] sm:$0xff] %v764
        %s767 = sand.u32 %s109, 1
        %s768 = scalar_lea.sflag [#allocation5], %s767
        %s769 = sand.u32 %s109, 1
        %s770 = smul.addr %s769, 16
        %s771 = scalar_lea.vmem [#allocation4], %s770
        // Predicated region
        $region71: #{tpu_custom_call.1} parent=65 // pred_check
          %p772 = pneg %p119
        $region72: #{tpu_custom_call.1} parent=65 // pred_check_branch
          %774 = sbr.rel (%p772) target = $region74
        $region73: #{tpu_custom_call.1} parent=65 // pred_region
          %s775 = smul.u32 2, %s22
          %777 = vsyncadd %s768, 0
          %s778 = smul.addr %s21, 6
          %s779 = sadd.s32 %s775, %s778
          %s780 = smul.addr %s779, 8
          %s781 = scalar_lea.hbm %s3, %s780
          %s782 = sshll.u32 %s771, 4
          %s783 = int_to_ptr.vmem [resolvable:$true] %s782
          %s784 = sshll.u32 %s781, 4
          %s785 = int_to_ptr.hbm [resolvable:$true] %s784
          %790 = dma.vmem_to_hbm [thread:$0]  %s783, 256, %s785, %s768, 128, 128, 8
        $region74: #{tpu_custom_call.1} parent=65 // pred_fallthru
          _
      $region66: #{tpu_custom_call.1} parent=5 // pred_fallthru
        _
      %p791 = scmp.le.s32.totalorder 2, %s12
      // Predicated region
      $region75: #{tpu_custom_call.1} parent=5 // pred_check
        %p792 = pneg %p791
      $region76: #{tpu_custom_call.1} parent=5 // pred_check_branch
        %794 = sbr.rel (%p792) target = $region78
      $region77: #{tpu_custom_call.1} parent=5 // pred_region
        %s795 = ssub.s32 %s12, 2
        // Predicated region
        $region79: #{tpu_custom_call.1} parent=77 // pred_check
          %p796 = pneg %p125
        $region80: #{tpu_custom_call.1} parent=77 // pred_check_branch
          %798 = sbr.rel (%p796) target = $region82
        $region81: #{tpu_custom_call.1} parent=77 // pred_region
          %s799 = sand.u32 %s110, 1
          %s800 = scalar_lea.sflag [#allocation5], %s799
          %s801 = sand.u32 %s110, 1
          %s802 = smul.addr %s801, 16
          %s803 = scalar_lea.vmem [#allocation4], %s802
          %805 = dma.done %s800, 256
        $region82: #{tpu_custom_call.1} parent=77 // pred_fallthru
          _
      $region78: #{tpu_custom_call.1} parent=5 // pred_fallthru
        _
    $region6: #{tpu_custom_call.1} parent=1 // loop_footer
      %s16 = sadd.s32 1, %s12
    $region7: #{tpu_custom_call.1} parent=1 // loop_footer_branch
      %11 = sbr.rel target = $region3
    $region8: #{tpu_custom_call.1} parent=1 // loop_exit
      _
    %806 = vsyncpa [#allocation5], 1
    %s807 = scalar_lea.sflag [#allocation5], 1
    %808 = vsyncpa %s807, 1

</llo_original>
